<compile_context>
chip_gen: v7x
topology: tpu7x:2x2x1
jax: 0.10.0
libtpu: 0.0.40
codegen_flags: <defaults>
</compile_context>

<pallas_src>
import jax
import jax.numpy as jnp
from jax.experimental import pallas as pl
from jax.experimental.pallas import tpu as pltpu


def _zero_nan_inf(x):
    # zeroNanInfs: replace NaN / +-Inf with 0
    return jnp.where(jnp.isfinite(x), x, jnp.zeros_like(x))


def _fused_bp_update_kernel(gamma_ref, ratio_ref, a_ref, imgt_ref, isens_ref,
                            imgt_out_ref, acc_ref):
    """Fused back-projection (ratio @ A) + MAP-EM elementwise update.

    Grid: (j over N tiles [parallel], k over Ndet tiles [arbitrary/reduction]).
    acc_ref accumulates the fdb tile across k; the update runs at k == last.
    """
    k = pl.program_id(1)

    @pl.when(k == 0)
    def _():
        acc_ref[...] = jnp.zeros_like(acc_ref)

    # Back-projection partial sum on the MXU: fdb_tile += ratio_tile @ A_tile.
    acc_ref[...] += jnp.dot(ratio_ref[...], a_ref[...],
                            preferred_element_type=jnp.float32)

    @pl.when(k == pl.num_programs(1) - 1)
    def _():
        gamma = gamma_ref[0]                       # scalar (SMEM)
        imgt_prev = imgt_ref[...]                  # [B, tn] previous imgt
        fdb = acc_ref[...]                         # [B, tn] back-projection
        S = isens_ref[...]                         # [1, tn], broadcasts over B

        img = _zero_nan_inf(imgt_prev)             # toNumpy(imgt) scrub
        # TODO(synk): RSTR (Swin-transformer regularizer) is not defined in the
        # provided source; identity stand-in -> reg = zeroNanInfs(imgt) = img.
        reg = img

        img_em = _zero_nan_inf(img * fdb * S)      # toTorch(img_em)
        gS = gamma * S                             # hoisted gamma*S, reused twice
        a = 1.0 - gS * reg
        denom = a + jnp.sqrt(a * a + 4.0 * gS * img_em)
        # divide -> EUP reciprocal (separate issue slot; kernel is mem-bound anyway)
        imgt_out_ref[...] = 2.0 * img_em * pl.reciprocal(denom, approx=True)


def transem_fused_update(gamma, ratio, A, imgt, isens, *,
                         tile_n=512, tile_k=256):
    """One MAP-EM subset update with fused back-projection.

    gamma: (1,) f32          ratio: [B, Ndet] = prompts / (A img + eps)
    A:     [Ndet, N]         imgt:  [B, N] previous estimate (unscrubbed)
    isens: [1, N] zeroNanInfs-scrubbed inverse sensitivity
    Returns imgt [B, N]  (NOT NaN-scrubbed, matching the torch imgt tensor).
    """
    B, N = imgt.shape
    Ndet = A.shape[0]
    tile_n = min(tile_n, N)
    tile_k = min(tile_k, Ndet)
    assert N % tile_n == 0 and (tile_n % 128 == 0 or tile_n == N)
    assert Ndet % tile_k == 0 and (tile_k % 128 == 0 or tile_k == Ndet)
    nj = N // tile_n
    nk = Ndet // tile_k

    vspec_bn = pl.BlockSpec((B, tile_n), lambda j, k: (0, j))
    in_specs = [
        pl.BlockSpec(memory_space=pltpu.MemorySpace.SMEM),       # gamma scalar
        pl.BlockSpec((B, tile_k), lambda j, k: (0, k)),          # ratio
        pl.BlockSpec((tile_k, tile_n), lambda j, k: (k, j)),     # A (streamed, MXU operand)
        vspec_bn,                                                # imgt (previous estimate)
        pl.BlockSpec((1, tile_n), lambda j, k: (0, j)),          # isens (no [B,N] broadcast)
    ]

    # Double-buffered working-set estimate (f32 bytes) -> VMEM limit with headroom.
    ws = 4 * (2 * (B * tile_k + tile_k * tile_n + B * tile_n + tile_n)
              + 2 * B * tile_n      # double-buffered output
              + B * tile_n)         # accumulator scratch
    vmem_limit = int(min(max(2 * ws, 32 << 20), 48 << 20))   # >=32 MiB, <=48 MiB (v7x-safe)

    return pl.pallas_call(
        _fused_bp_update_kernel,
        out_shape=jax.ShapeDtypeStruct((B, N), jnp.float32),
        grid=(nj, nk),
        in_specs=in_specs,
        out_specs=vspec_bn,
        scratch_shapes=[pltpu.VMEM((B, tile_n), jnp.float32)],
        compiler_params=pltpu.CompilerParams(
            dimension_semantics=("parallel", "arbitrary"),
            vmem_limit_bytes=vmem_limit),
    )(gamma, ratio, A, imgt, isens)


def transem_forward(gamma, A, prompts, matrix_size, niters=2, nsubs=1):
    """JAX/Pallas equivalent of TransEM.forward (2D path, crop_factor=0).

    gamma:   (1,)        -- nn.Parameter(torch.rand(1))
    A:       (Ndet, N)   -- synthetic dense PET system matrix (external object)
    prompts: (B, Ndet)   -- measured data
    """
    B = prompts.shape[0]
    M0, M1 = matrix_size
    N = M0 * M1
    eps = 1e-8

    # ---- external PET operators (glue; not part of the nn.Module's own compute) ----
    # Loop-invariant inverse sensitivity (subset 0; valid because nsubs == 1),
    # kept at [1, N] and zeroNanInfs-scrubbed once (hoisted out of the loop).
    sens = jnp.sum(A, axis=0)                                   # A^T @ 1
    isens = (1.0 / (sens + eps))[None, :].astype(jnp.float32)   # [1, N]
    isens = _zero_nan_inf(isens)

    # img = np.ones(...); imgt = toTorch(img) -> ones
    imgt = jnp.ones((B, N), jnp.float32)

    for _ in range(niters):
        for _s in range(nsubs):
            # PET.forwardDivideBackwardBatch2D, forward half (tiny [B, Ndet] result)
            # in XLA; the back-projection half is fused into the Pallas kernel.
            img = _zero_nan_inf(imgt)                           # toNumpy scrub (fuses into matmul)
            proj = img @ A.T                                    # [B, Ndet]
            ratio = prompts / (proj + eps)                      # [B, Ndet]
            imgt = transem_fused_update(gamma, ratio, A, imgt, isens)

    # return unCrop(imgt): Fortran reshape [B, N] -> [B, M0, M1], then NCHW [B,1,M0,M1]
    out = imgt.reshape(B, M1, M0).transpose(0, 2, 1)[:, None, :, :]
    return out


if __name__ == "__main__":
    key = jax.random.PRNGKey(0)
    k1, k2, k3 = jax.random.split(key, 3)

    B = 2
    M0 = M1 = 32            # image 32x32 -> N = 1024 (two 512-wide N tiles)
    N = M0 * M1
    Ndet = 256              # single 256-wide K tile over the reduction axis

    # deterministic parameter init (TransEM.__init__: gamma = nn.Parameter(torch.rand(1)))
    gamma = jax.random.uniform(k1, (1,), dtype=jnp.float32)
    # synthetic PET system matrix + prompts (the real ones come from the external PET object)
    A = jax.random.uniform(k2, (Ndet, N), dtype=jnp.float32)
    prompts = jax.random.uniform(k3, (B, Ndet), dtype=jnp.float32) * 10.0

    fwd = jax.jit(lambda g, a, p: transem_forward(g, a, p, (M0, M1),
                                                  niters=2, nsubs=1))
    out = jax.block_until_ready(fwd(gamma, A, prompts))
    assert out.shape == (B, 1, M0, M1)
    assert bool(jnp.all(jnp.isfinite(out)))
    print("KERNEL_OK")
</pallas_src>

<mosaic_0001>
module attributes {stable_mosaic.version = 11 : i64} {
  func.func @_fused_bp_update_kernel(%arg0: i32, %arg1: i32, %arg2: memref<1xf32, #tpu.memory_space<smem>>, %arg3: memref<2x256xf32, #tpu.memory_space<vmem>>, %arg4: memref<256x512xf32, #tpu.memory_space<vmem>>, %arg5: memref<2x512xf32, #tpu.memory_space<vmem>>, %arg6: memref<1x512xf32, #tpu.memory_space<vmem>>, %arg7: memref<2x512xf32, #tpu.memory_space<vmem>>, %arg8: memref<2x512xf32, #tpu.memory_space<vmem>>) attributes {dimension_semantics = [#tpu.dimension_semantics<parallel>, #tpu.dimension_semantics<arbitrary>], iteration_bounds = array<i64: 2, 1>, scalar_prefetch = 0 : i64, scratch_operands = 1 : i64, tpu.core_type = #tpu.core_type<tc>, window_params = [{transform_indices = @transform_0, window_bounds = array<i64: 1>}, {transform_indices = @transform_1, window_bounds = array<i64: 2, 256>}, {transform_indices = @transform_2, window_bounds = array<i64: 256, 512>}, {transform_indices = @transform_3, window_bounds = array<i64: 2, 512>}, {transform_indices = @transform_4, window_bounds = array<i64: 1, 512>}, {transform_indices = @transform_5, window_bounds = array<i64: 2, 512>}]} {
    %c0_i32 = arith.constant 0 : i32
    %0 = arith.cmpi eq, %arg1, %c0_i32 : i32
    %1 = arith.extui %0 : i1 to i32
    %c0_i32_0 = arith.constant 0 : i32
    %2 = arith.cmpi ne, %1, %c0_i32_0 : i32
    scf.if %2 {
      %cst_10 = arith.constant 0.000000e+00 : f32
      %12 = vector.broadcast %cst_10 : f32 to vector<2x512xf32>
      %c0_11 = arith.constant 0 : index
      %c0_12 = arith.constant 0 : index
      %13 = vector.load %arg8[%c0_11, %c0_12] : memref<2x512xf32, #tpu.memory_space<vmem>>, vector<2x512xf32>
      tpu.vector_store %arg8[%c0_11, %c0_12], %12 {strides = array<i32>} : memref<2x512xf32, #tpu.memory_space<vmem>>, vector<2x512xf32>,
    } else {
    }
    %c0 = arith.constant 0 : index
    %c0_1 = arith.constant 0 : index
    %3 = vector.load %arg8[%c0, %c0_1] : memref<2x512xf32, #tpu.memory_space<vmem>>, vector<2x512xf32>
    %c0_2 = arith.constant 0 : index
    %c0_3 = arith.constant 0 : index
    %4 = vector.load %arg3[%c0_2, %c0_3] : memref<2x256xf32, #tpu.memory_space<vmem>>, vector<2x256xf32>
    %c0_4 = arith.constant 0 : index
    %c0_5 = arith.constant 0 : index
    %5 = vector.load %arg4[%c0_4, %c0_5] : memref<256x512xf32, #tpu.memory_space<vmem>>, vector<256x512xf32>
    %cst = arith.constant dense<0.000000e+00> : vector<2x512xf32>
    %6 = tpu.matmul %4, %5, %cst {dimension_numbers = #tpu.dot_dimension_numbers<[1], [0], [0], [1], [0, 0, 1, 1], [], []>} : vector<2x256xf32>, vector<256x512xf32>, vector<2x512xf32> -> vector<2x512xf32>
    %7 = arith.addf %3, %6 : vector<2x512xf32>
    %c0_6 = arith.constant 0 : index
    %c0_7 = arith.constant 0 : index
    %8 = vector.load %arg8[%c0_6, %c0_7] : memref<2x512xf32, #tpu.memory_space<vmem>>, vector<2x512xf32>
    tpu.vector_store %arg8[%c0_6, %c0_7], %7 {strides = array<i32>} : memref<2x512xf32, #tpu.memory_space<vmem>>, vector<2x512xf32>,
    %c0_i32_8 = arith.constant 0 : i32
    %9 = arith.cmpi eq, %arg1, %c0_i32_8 : i32
    %10 = arith.extui %9 : i1 to i32
    %c0_i32_9 = arith.constant 0 : i32
    %11 = arith.cmpi ne, %10, %c0_i32_9 : i32
    scf.if %11 {
      %c0_10 = arith.constant 0 : index
      %12 = memref.load %arg2[%c0_10] : memref<1xf32, #tpu.memory_space<smem>>
      %c0_11 = arith.constant 0 : index
      %c0_12 = arith.constant 0 : index
      %13 = vector.load %arg5[%c0_11, %c0_12] : memref<2x512xf32, #tpu.memory_space<vmem>>, vector<2x512xf32>
      %c0_13 = arith.constant 0 : index
      %c0_14 = arith.constant 0 : index
      %14 = vector.load %arg8[%c0_13, %c0_14] : memref<2x512xf32, #tpu.memory_space<vmem>>, vector<2x512xf32>
      %c0_15 = arith.constant 0 : index
      %c0_16 = arith.constant 0 : index
      %15 = vector.load %arg6[%c0_15, %c0_16] : memref<1x512xf32, #tpu.memory_space<vmem>>, vector<1x512xf32>
      %16 = tpu.weird %13 : vector<2x512xf32> -> vector<2x512xi1>
      %cst_17 = arith.constant dense<true> : vector<2x512xi1>
      %17 = arith.xori %16, %cst_17 : vector<2x512xi1>
      %cst_18 = arith.constant 0.000000e+00 : f32
      %18 = vector.broadcast %cst_18 : f32 to vector<2x512xf32>
      %19 = arith.select %17, %13, %18 : vector<2x512xi1>, vector<2x512xf32>
      %20 = arith.mulf %19, %14 : vector<2x512xf32>
      %21 = vector.broadcast %15 : vector<1x512xf32> to vector<2x512xf32>
      %22 = arith.mulf %20, %21 : vector<2x512xf32>
      %23 = tpu.weird %22 : vector<2x512xf32> -> vector<2x512xi1>
      %cst_19 = arith.constant dense<true> : vector<2x512xi1>
      %24 = arith.xori %23, %cst_19 : vector<2x512xi1>
      %cst_20 = arith.constant 0.000000e+00 : f32
      %25 = vector.broadcast %cst_20 : f32 to vector<2x512xf32>
      %26 = arith.select %24, %22, %25 : vector<2x512xi1>, vector<2x512xf32>
      %27 = vector.broadcast %12 : f32 to vector<1x512xf32>
      %28 = arith.mulf %27, %15 : vector<1x512xf32>
      %29 = vector.broadcast %28 : vector<1x512xf32> to vector<2x512xf32>
      %30 = arith.mulf %29, %19 : vector<2x512xf32>
      %cst_21 = arith.constant 1.000000e+00 : f32
      %31 = vector.broadcast %cst_21 : f32 to vector<2x512xf32>
      %32 = arith.subf %31, %30 : vector<2x512xf32>
      %33 = arith.mulf %32, %32 : vector<2x512xf32>
      %cst_22 = arith.constant 4.000000e+00 : f32
      %34 = vector.broadcast %cst_22 : f32 to vector<1x512xf32>
      %35 = arith.mulf %34, %28 : vector<1x512xf32>
      %36 = vector.broadcast %35 : vector<1x512xf32> to vector<2x512xf32>
      %37 = arith.mulf %36, %26 : vector<2x512xf32>
      %38 = arith.addf %33, %37 : vector<2x512xf32>
      %39 = math.sqrt %38 : vector<2x512xf32>
      %40 = arith.addf %32, %39 : vector<2x512xf32>
      %cst_23 = arith.constant 2.000000e+00 : f32
      %41 = vector.broadcast %cst_23 : f32 to vector<2x512xf32>
      %42 = arith.mulf %41, %26 : vector<2x512xf32>
      %43 = tpu.reciprocal %40 {approx = true} : vector<2x512xf32> -> vector<2x512xf32>
      %44 = arith.mulf %42, %43 : vector<2x512xf32>
      %c0_24 = arith.constant 0 : index
      %c0_25 = arith.constant 0 : index
      %45 = vector.load %arg7[%c0_24, %c0_25] : memref<2x512xf32, #tpu.memory_space<vmem>>, vector<2x512xf32>
      tpu.vector_store %arg7[%c0_24, %c0_25], %44 {strides = array<i32>} : memref<2x512xf32, #tpu.memory_space<vmem>>, vector<2x512xf32>,
    } else {
    }
    return
  }
  func.func @transform_0(%arg0: i32, %arg1: i32) -> i32 {
    %c0_i32 = arith.constant 0 : i32
    %c0_i32_0 = arith.constant 0 : i32
    return %c0_i32 : i32
  }
  func.func @transform_1(%arg0: i32, %arg1: i32) -> (i32, i32) {
    %c0_i32 = arith.constant 0 : i32
    %c0_i32_0 = arith.constant 0 : i32
    return %c0_i32, %arg1 : i32, i32
  }
  func.func @transform_2(%arg0: i32, %arg1: i32) -> (i32, i32) {
    %c0_i32 = arith.constant 0 : i32
    return %arg1, %arg0 : i32, i32
  }
  func.func @transform_3(%arg0: i32, %arg1: i32) -> (i32, i32) {
    %c0_i32 = arith.constant 0 : i32
    %c0_i32_0 = arith.constant 0 : i32
    return %c0_i32, %arg0 : i32, i32
  }
  func.func @transform_4(%arg0: i32, %arg1: i32) -> (i32, i32) {
    %c0_i32 = arith.constant 0 : i32
    %c0_i32_0 = arith.constant 0 : i32
    return %c0_i32, %arg0 : i32, i32
  }
  func.func @transform_5(%arg0: i32, %arg1: i32) -> (i32, i32) {
    %c0_i32 = arith.constant 0 : i32
    %c0_i32_0 = arith.constant 0 : i32
    return %c0_i32, %arg0 : i32, i32
  }
}

</mosaic_0001>

<llo_original>
// kernel: _lambda_.2
$region0: #{_lambda_.2}
  #allocation0 [shape = 'u32[]', space=smem, size = 0x4, offset = 0x4, fixed_abs, tag = 'smem constant byte address 0x4 - core index']
  #allocation1 [shape = 'u32[144,128]{1,0:T(1,128)}', space=vmem, size = 0x12000, scoped, tag = 'internal scratch']
  #allocation2 [shape = 'f32[2,512]{1,0:T(2,128)}', space=vmem, size = 0x1000, scoped, tag = 'scratch operand']
  #allocation3 [shape = 'f32[1]{0:T(128)S(6)}', space=smem, size = 0x200, scoped, tag = 'scoped memory for _lambda_.2']
  %s0 = inlined_call_operand.<no memory space> [shape: f32[1], index: 0, kind: input, shape index: {}]
  %s1 = inlined_call_operand.vmem [shape: f32[2,256], index: 1, kind: input, shape index: {}]
  %s2 = inlined_call_operand.vmem [shape: f32[256,1024], index: 2, kind: input, shape index: {}]
  %s3 = inlined_call_operand.vmem [shape: f32[2,1024], index: 3, kind: input, shape index: {}]
  %s4 = inlined_call_operand.vmem [shape: f32[1,1024], index: 4, kind: input, shape index: {}]
  %s5 = inlined_call_operand.vmem [shape: f32[2,1024], index: 5, kind: output, shape index: {}]
  %s6 = sld [smem:[#allocation0]]
  $region84: #{_lambda_.2} parent=0
    _
  %s8 = ssub.s32 1, %s6
  %s9 = scalar_select 0, %s8, %s6
  %10 = sst [smem:[#allocation3]] %s0
  $region1: #{_lambda_.2} parent=0
    #allocation4 [shape = 'u8[1048576]{0}', space=vmem, size = 0x100000, scoped, tag = 'input window, operand 2']
    loop: start=0, step=1, limit=4
    $region2: #{_lambda_.2} parent=1 // loop_pre_header
      _
    $region3: #{_lambda_.2} parent=1 // loop_header
      %s12 = sphi 0, %s16
      %p13 = scmp.ge.s32.totalorder %s12, 4
      %s19 = sphi 0, %s31
      %s20 = sphi 0, %s27
      %s21 = sphi 0, %s19
      %s22 = sphi 0, %s20
      %s23 = sphi 0, %s21
      %s24 = sphi 0, %s22
      %s32 = sphi 0, %s32
      %s34 = sphi 0, %s32
      %s35 = sphi 0, %s34
      %s49 = sphi 0, %s35
      %s55 = sphi 0, %s57
      %s58 = sphi 0, %s55
      %s59 = sphi 0, %s58
      %s75 = sphi 0, %s59
      %s83 = sphi 0, %s85
      %s86 = sphi 0, %s83
      %s87 = sphi 0, %s86
      %s103 = sphi 0, %s87
      %s109 = sphi 0, %s111
      %s112 = sphi 0, %s109
      %s113 = sphi 0, %s112
      %s129 = sphi 0, %s113
      %s135 = sphi 0, %s137
      %s138 = sphi 0, %s135
      %s139 = sphi 0, %s138
      %s155 = sphi 0, %s139
      %s161 = sphi 0, %s163
      %s164 = sphi 0, %s161
      %s165 = sphi 0, %s164
      %s181 = sphi 0, %s165
    $region4: #{_lambda_.2} parent=1 // loop_header_branch
      %15 = sbr.rel (%p13) target = $region8
    $region5: #{_lambda_.2} parent=1 // loop_body
      %s17 = ssub.s32 %s12, 1
      %s18 = ssub.s32 %s12, 2
      %s25 = sadd.s32 1, %s20
      %p26 = scmp.ge.s32.totalorder %s25, 1
      %s27 = scalar_select %p26, 0, %s25
      %s28 = sadd.s32 1, %s19
      %s29 = scalar_select %p26, %s28, %s19
      %p30 = scmp.ge.s32.totalorder %s29, 2
      %s31 = scalar_select %p30, 0, %s29
      %s33 = sadd.s32 %s32, 1
      %p36 = scmp.eq.s32.totalorder %s12, 1
      %p37 = scmp.ne.s32.totalorder %s32, %s34
      %p38 = scmp.eq.s32.totalorder %s12, 0
      %p39 = por %p37, %p38
      %p40 = scmp.ne.s32.totalorder %s32, %s34
      %p41 = scmp.eq.s32.totalorder %s17, 1
      %p42 = por %p40, %p41
      %p43 = scmp.ne.s32.totalorder %s34, %s35
      %p44 = scmp.eq.s32.totalorder %s17, 0
      %p45 = por %p43, %p44
      %p46 = scmp.ne.s32.totalorder %s34, %s35
      %p47 = scmp.eq.s32.totalorder %s18, 1
      %p48 = por %p46, %p47
      %p50 = scmp.ne.s32.totalorder %s35, %s49
      %p51 = scmp.eq.s32.totalorder %s18, 0
      %p52 = por %p50, %p51
      %s53 = ssub.s32 %s20, %s27
      %p54 = scmp.eq.s32.totalorder %s53, 0
      %s56 = sadd.s32 %s55, 1
      %s57 = scalar_select %p54, %s55, %s56
      %p60 = pneg %p54
      %p61 = scmp.eq.s32.totalorder %s12, 1
      %p62 = por %p60, %p61
      %p63 = scmp.ne.s32.totalorder %s55, %s58
      %p64 = scmp.eq.s32.totalorder %s12, 0
      %p65 = por %p63, %p64
      %p66 = scmp.ne.s32.totalorder %s55, %s58
      %p67 = scmp.eq.s32.totalorder %s17, 1
      %p68 = por %p66, %p67
      %p69 = scmp.ne.s32.totalorder %s58, %s59
      %p70 = scmp.eq.s32.totalorder %s17, 0
      %p71 = por %p69, %p70
      %p72 = scmp.ne.s32.totalorder %s58, %s59
      %p73 = scmp.eq.s32.totalorder %s18, 1
      %p74 = por %p72, %p73
      %p76 = scmp.ne.s32.totalorder %s59, %s75
      %p77 = scmp.eq.s32.totalorder %s18, 0
      %p78 = por %p76, %p77
      %s79 = ssub.s32 %s20, %s27
      %s80 = ssub.s32 %s19, %s31
      %s81 = sor.u32 %s79, %s80
      %p82 = scmp.eq.s32.totalorder %s81, 0
      %s84 = sadd.s32 %s83, 1
      %s85 = scalar_select %p82, %s83, %s84
      %p88 = pneg %p82
      %p89 = scmp.eq.s32.totalorder %s12, 1
      %p90 = por %p88, %p89
      %p91 = scmp.ne.s32.totalorder %s83, %s86
      %p92 = scmp.eq.s32.totalorder %s12, 0
      %p93 = por %p91, %p92
      %p94 = scmp.ne.s32.totalorder %s83, %s86
      %p95 = scmp.eq.s32.totalorder %s17, 1
      %p96 = por %p94, %p95
      %p97 = scmp.ne.s32.totalorder %s86, %s87
      %p98 = scmp.eq.s32.totalorder %s17, 0
      %p99 = por %p97, %p98
      %p100 = scmp.ne.s32.totalorder %s86, %s87
      %p101 = scmp.eq.s32.totalorder %s18, 1
      %p102 = por %p100, %p101
      %p104 = scmp.ne.s32.totalorder %s87, %s103
      %p105 = scmp.eq.s32.totalorder %s18, 0
      %p106 = por %p104, %p105
      %s107 = ssub.s32 %s19, %s31
      %p108 = scmp.eq.s32.totalorder %s107, 0
      %s110 = sadd.s32 %s109, 1
      %s111 = scalar_select %p108, %s109, %s110
      %p114 = pneg %p108
      %p115 = scmp.eq.s32.totalorder %s12, 1
      %p116 = por %p114, %p115
      %p117 = scmp.ne.s32.totalorder %s109, %s112
      %p118 = scmp.eq.s32.totalorder %s12, 0
      %p119 = por %p117, %p118
      %p120 = scmp.ne.s32.totalorder %s109, %s112
      %p121 = scmp.eq.s32.totalorder %s17, 1
      %p122 = por %p120, %p121
      %p123 = scmp.ne.s32.totalorder %s112, %s113
      %p124 = scmp.eq.s32.totalorder %s17, 0
      %p125 = por %p123, %p124
      %p126 = scmp.ne.s32.totalorder %s112, %s113
      %p127 = scmp.eq.s32.totalorder %s18, 1
      %p128 = por %p126, %p127
      %p130 = scmp.ne.s32.totalorder %s113, %s129
      %p131 = scmp.eq.s32.totalorder %s18, 0
      %p132 = por %p130, %p131
      %s133 = ssub.s32 %s19, %s31
      %p134 = scmp.eq.s32.totalorder %s133, 0
      %s136 = sadd.s32 %s135, 1
      %s137 = scalar_select %p134, %s135, %s136
      %p140 = pneg %p134
      %p141 = scmp.eq.s32.totalorder %s12, 1
      %p142 = por %p140, %p141
      %p143 = scmp.ne.s32.totalorder %s135, %s138
      %p144 = scmp.eq.s32.totalorder %s12, 0
      %p145 = por %p143, %p144
      %p146 = scmp.ne.s32.totalorder %s135, %s138
      %p147 = scmp.eq.s32.totalorder %s17, 1
      %p148 = por %p146, %p147
      %p149 = scmp.ne.s32.totalorder %s138, %s139
      %p150 = scmp.eq.s32.totalorder %s17, 0
      %p151 = por %p149, %p150
      %p152 = scmp.ne.s32.totalorder %s138, %s139
      %p153 = scmp.eq.s32.totalorder %s18, 1
      %p154 = por %p152, %p153
      %p156 = scmp.ne.s32.totalorder %s139, %s155
      %p157 = scmp.eq.s32.totalorder %s18, 0
      %p158 = por %p156, %p157
      %s159 = ssub.s32 %s19, %s31
      %p160 = scmp.eq.s32.totalorder %s159, 0
      %s162 = sadd.s32 %s161, 1
      %s163 = scalar_select %p160, %s161, %s162
      %p166 = pneg %p160
      %p167 = scmp.eq.s32.totalorder %s12, 1
      %p168 = por %p166, %p167
      %p169 = scmp.ne.s32.totalorder %s161, %s164
      %p170 = scmp.eq.s32.totalorder %s12, 0
      %p171 = por %p169, %p170
      %p172 = scmp.ne.s32.totalorder %s161, %s164
      %p173 = scmp.eq.s32.totalorder %s17, 1
      %p174 = por %p172, %p173
      %p175 = scmp.ne.s32.totalorder %s164, %s165
      %p176 = scmp.eq.s32.totalorder %s17, 0
      %p177 = por %p175, %p176
      %p178 = scmp.ne.s32.totalorder %s164, %s165
      %p179 = scmp.eq.s32.totalorder %s18, 1
      %p180 = por %p178, %p179
      %p182 = scmp.ne.s32.totalorder %s165, %s181
      %p183 = scmp.eq.s32.totalorder %s18, 0
      %p184 = por %p182, %p183
      %p185 = scmp.le.s32.totalorder 1, %s12
      %p186 = scmp.lt.s32.totalorder %s12, 3
      %p187 = pnand %p185, %p186
      %p188 = pneg %p187
      // Predicated region
      $region9: #{_lambda_.2} parent=5 // pred_check
        _
      $region10: #{_lambda_.2} parent=5 // pred_check_branch
        %190 = sbr.rel (%p187) target = $region12
      $region11: #{_lambda_.2} parent=5 // pred_region
        %s191 = ssub.s32 %s12, 1
        // Predicated region
        $region13: #{_lambda_.2} parent=11 // pred_check
          %p192 = pneg %p45
        $region14: #{_lambda_.2} parent=11 // pred_check_branch
          %194 = sbr.rel (%p192) target = $region16
        $region15: #{_lambda_.2} parent=11 // pred_region
          _
        $region16: #{_lambda_.2} parent=11 // pred_fallthru
          _
        // Predicated region
        $region17: #{_lambda_.2} parent=11 // pred_check
          %p195 = pneg %p71
        $region18: #{_lambda_.2} parent=11 // pred_check_branch
          %197 = sbr.rel (%p195) target = $region20
        $region19: #{_lambda_.2} parent=11 // pred_region
          %s198 = smul.u32 2, %s22
          %p199 = scmp.lt.s32.totalorder %s198, 1
          %s200 = scalar_select %p199, %s198, 1
          %s201 = smul.addr %s200, 2
          %s202 = scalar_lea.vmem %s1, %s201
          %s203 = smul.u32 2, %s22
        $region20: #{_lambda_.2} parent=11 // pred_fallthru
          _
      $region12: #{_lambda_.2} parent=5 // pred_fallthru
        _
      %p204 = scmp.lt.s32.totalorder %s12, 2
      // Predicated region
      $region21: #{_lambda_.2} parent=5 // pred_check
        %p205 = pneg %p204
      $region22: #{_lambda_.2} parent=5 // pred_check_branch
        %207 = sbr.rel (%p205) target = $region24
      $region23: #{_lambda_.2} parent=5 // pred_region
        // Predicated region
        $region25: #{_lambda_.2} parent=23 // pred_check
          %p208 = pneg %p93
        $region26: #{_lambda_.2} parent=23 // pred_check_branch
          %210 = sbr.rel (%p208) target = $region28
        $region27: #{_lambda_.2} parent=23 // pred_region
          %s211 = sand.u32 %s83, 1
          %s212 = sand.u32 %s83, 1
          %s213 = smul.addr %s212, 1024
          %s214 = scalar_lea.vmem [#allocation4], %s213
          %s215 = smul.u32 32, %s20
          %s216 = smul.u32 4, %s19
          %s217 = smul.addr %s215, 8
          %s218 = sadd.s32 %s216, %s217
          %s219 = smul.addr %s218, 8
          %s220 = scalar_lea.vmem %s2, %s219
          // Predicated region
          $region29: #{_lambda_.2} parent=27 // pred_check
            _
          $region30: #{_lambda_.2} parent=27 // pred_check_branch
            %222 = sbr.rel (0) target = $region32
          $region31: #{_lambda_.2} parent=27 // pred_region
            // Predicated region
            $region33: #{_lambda_.2} parent=31 // pred_check
              _
            $region34: #{_lambda_.2} parent=31 // pred_check_branch
              %224 = sbr.rel (0) target = $region36
            $region35: #{_lambda_.2} parent=31 // pred_region
              loop: start=0, step=1, limit=1
              $region37: #{_lambda_.2} parent=35 // loop_pre_header
                _
              $region38: #{_lambda_.2} parent=35 // loop_header
                %s226 = sphi 0, %s230
                %p227 = scmp.ge.s32.totalorder %s226, 1
                %s231 = sphi %s220, %s220
                %s232 = sphi %s214, %s214
              $region39: #{_lambda_.2} parent=35 // loop_header_branch
                %229 = sbr.rel (%p227) target = $region43
              $region40: #{_lambda_.2} parent=35 // loop_body
                %v233 = vld [vmem:[%s231] sm:$0xff]
                %234 = vst [vmem:[%s232] sm:$0xff] %v233
                %v235 = vld [vmem:[%s231 + $0x8] sm:$0xff]
                %236 = vst [vmem:[%s232 + $0x8] sm:$0xff] %v235
                %v237 = vld [vmem:[%s231 + $0x10] sm:$0xff]
                %238 = vst [vmem:[%s232 + $0x10] sm:$0xff] %v237
                %v239 = vld [vmem:[%s231 + $0x18] sm:$0xff]
                %240 = vst [vmem:[%s232 + $0x18] sm:$0xff] %v239
                %v241 = vld [vmem:[%s231 + $0x40] sm:$0xff]
                %242 = vst [vmem:[%s232 + $0x20] sm:$0xff] %v241
                %v243 = vld [vmem:[%s231 + $0x48] sm:$0xff]
                %244 = vst [vmem:[%s232 + $0x28] sm:$0xff] %v243
                %v245 = vld [vmem:[%s231 + $0x50] sm:$0xff]
                %246 = vst [vmem:[%s232 + $0x30] sm:$0xff] %v245
                %v247 = vld [vmem:[%s231 + $0x58] sm:$0xff]
                %248 = vst [vmem:[%s232 + $0x38] sm:$0xff] %v247
                %v249 = vld [vmem:[%s231 + $0x80] sm:$0xff]
                %250 = vst [vmem:[%s232 + $0x40] sm:$0xff] %v249
                %v251 = vld [vmem:[%s231 + $0x88] sm:$0xff]
                %252 = vst [vmem:[%s232 + $0x48] sm:$0xff] %v251
                %v253 = vld [vmem:[%s231 + $0x90] sm:$0xff]
                %254 = vst [vmem:[%s232 + $0x50] sm:$0xff] %v253
                %v255 = vld [vmem:[%s231 + $0x98] sm:$0xff]
                %256 = vst [vmem:[%s232 + $0x58] sm:$0xff] %v255
                %v257 = vld [vmem:[%s231 + $0xc0] sm:$0xff]
                %258 = vst [vmem:[%s232 + $0x60] sm:$0xff] %v257
                %v259 = vld [vmem:[%s231 + $0xc8] sm:$0xff]
                %260 = vst [vmem:[%s232 + $0x68] sm:$0xff] %v259
                %v261 = vld [vmem:[%s231 + $0xd0] sm:$0xff]
                %262 = vst [vmem:[%s232 + $0x70] sm:$0xff] %v261
                %v263 = vld [vmem:[%s231 + $0xd8] sm:$0xff]
                %264 = vst [vmem:[%s232 + $0x78] sm:$0xff] %v263
                %v265 = vld [vmem:[%s231 + $0x100] sm:$0xff]
                %266 = vst [vmem:[%s232 + $0x80] sm:$0xff] %v265
                %v267 = vld [vmem:[%s231 + $0x108] sm:$0xff]
                %268 = vst [vmem:[%s232 + $0x88] sm:$0xff] %v267
                %v269 = vld [vmem:[%s231 + $0x110] sm:$0xff]
                %270 = vst [vmem:[%s232 + $0x90] sm:$0xff] %v269
                %v271 = vld [vmem:[%s231 + $0x118] sm:$0xff]
                %272 = vst [vmem:[%s232 + $0x98] sm:$0xff] %v271
                %v273 = vld [vmem:[%s231 + $0x140] sm:$0xff]
                %274 = vst [vmem:[%s232 + $0xa0] sm:$0xff] %v273
                %v275 = vld [vmem:[%s231 + $0x148] sm:$0xff]
                %276 = vst [vmem:[%s232 + $0xa8] sm:$0xff] %v275
                %v277 = vld [vmem:[%s231 + $0x150] sm:$0xff]
                %278 = vst [vmem:[%s232 + $0xb0] sm:$0xff] %v277
                %v279 = vld [vmem:[%s231 + $0x158] sm:$0xff]
                %280 = vst [vmem:[%s232 + $0xb8] sm:$0xff] %v279
                %v281 = vld [vmem:[%s231 + $0x180] sm:$0xff]
                %282 = vst [vmem:[%s232 + $0xc0] sm:$0xff] %v281
                %v283 = vld [vmem:[%s231 + $0x188] sm:$0xff]
                %284 = vst [vmem:[%s232 + $0xc8] sm:$0xff] %v283
                %v285 = vld [vmem:[%s231 + $0x190] sm:$0xff]
                %286 = vst [vmem:[%s232 + $0xd0] sm:$0xff] %v285
                %v287 = vld [vmem:[%s231 + $0x198] sm:$0xff]
                %288 = vst [vmem:[%s232 + $0xd8] sm:$0xff] %v287
                %v289 = vld [vmem:[%s231 + $0x1c0] sm:$0xff]
                %290 = vst [vmem:[%s232 + $0xe0] sm:$0xff] %v289
                %v291 = vld [vmem:[%s231 + $0x1c8] sm:$0xff]
                %292 = vst [vmem:[%s232 + $0xe8] sm:$0xff] %v291
                %v293 = vld [vmem:[%s231 + $0x1d0] sm:$0xff]
                %294 = vst [vmem:[%s232 + $0xf0] sm:$0xff] %v293
                %v295 = vld [vmem:[%s231 + $0x1d8] sm:$0xff]
                %296 = vst [vmem:[%s232 + $0xf8] sm:$0xff] %v295
                %v297 = vld [vmem:[%s231 + $0x200] sm:$0xff]
                %298 = vst [vmem:[%s232 + $0x100] sm:$0xff] %v297
                %v299 = vld [vmem:[%s231 + $0x208] sm:$0xff]
                %300 = vst [vmem:[%s232 + $0x108] sm:$0xff] %v299
                %v301 = vld [vmem:[%s231 + $0x210] sm:$0xff]
                %302 = vst [vmem:[%s232 + $0x110] sm:$0xff] %v301
                %v303 = vld [vmem:[%s231 + $0x218] sm:$0xff]
                %304 = vst [vmem:[%s232 + $0x118] sm:$0xff] %v303
                %v305 = vld [vmem:[%s231 + $0x240] sm:$0xff]
                %306 = vst [vmem:[%s232 + $0x120] sm:$0xff] %v305
                %v307 = vld [vmem:[%s231 + $0x248] sm:$0xff]
                %308 = vst [vmem:[%s232 + $0x128] sm:$0xff] %v307
                %v309 = vld [vmem:[%s231 + $0x250] sm:$0xff]
                %310 = vst [vmem:[%s232 + $0x130] sm:$0xff] %v309
                %v311 = vld [vmem:[%s231 + $0x258] sm:$0xff]
                %312 = vst [vmem:[%s232 + $0x138] sm:$0xff] %v311
                %v313 = vld [vmem:[%s231 + $0x280] sm:$0xff]
                %314 = vst [vmem:[%s232 + $0x140] sm:$0xff] %v313
                %v315 = vld [vmem:[%s231 + $0x288] sm:$0xff]
                %316 = vst [vmem:[%s232 + $0x148] sm:$0xff] %v315
                %v317 = vld [vmem:[%s231 + $0x290] sm:$0xff]
                %318 = vst [vmem:[%s232 + $0x150] sm:$0xff] %v317
                %v319 = vld [vmem:[%s231 + $0x298] sm:$0xff]
                %320 = vst [vmem:[%s232 + $0x158] sm:$0xff] %v319
                %v321 = vld [vmem:[%s231 + $0x2c0] sm:$0xff]
                %322 = vst [vmem:[%s232 + $0x160] sm:$0xff] %v321
                %v323 = vld [vmem:[%s231 + $0x2c8] sm:$0xff]
                %324 = vst [vmem:[%s232 + $0x168] sm:$0xff] %v323
                %v325 = vld [vmem:[%s231 + $0x2d0] sm:$0xff]
                %326 = vst [vmem:[%s232 + $0x170] sm:$0xff] %v325
                %v327 = vld [vmem:[%s231 + $0x2d8] sm:$0xff]
                %328 = vst [vmem:[%s232 + $0x178] sm:$0xff] %v327
                %v329 = vld [vmem:[%s231 + $0x300] sm:$0xff]
                %330 = vst [vmem:[%s232 + $0x180] sm:$0xff] %v329
                %v331 = vld [vmem:[%s231 + $0x308] sm:$0xff]
                %332 = vst [vmem:[%s232 + $0x188] sm:$0xff] %v331
                %v333 = vld [vmem:[%s231 + $0x310] sm:$0xff]
                %334 = vst [vmem:[%s232 + $0x190] sm:$0xff] %v333
                %v335 = vld [vmem:[%s231 + $0x318] sm:$0xff]
                %336 = vst [vmem:[%s232 + $0x198] sm:$0xff] %v335
                %v337 = vld [vmem:[%s231 + $0x340] sm:$0xff]
                %338 = vst [vmem:[%s232 + $0x1a0] sm:$0xff] %v337
                %v339 = vld [vmem:[%s231 + $0x348] sm:$0xff]
                %340 = vst [vmem:[%s232 + $0x1a8] sm:$0xff] %v339
                %v341 = vld [vmem:[%s231 + $0x350] sm:$0xff]
                %342 = vst [vmem:[%s232 + $0x1b0] sm:$0xff] %v341
                %v343 = vld [vmem:[%s231 + $0x358] sm:$0xff]
                %344 = vst [vmem:[%s232 + $0x1b8] sm:$0xff] %v343
                %v345 = vld [vmem:[%s231 + $0x380] sm:$0xff]
                %346 = vst [vmem:[%s232 + $0x1c0] sm:$0xff] %v345
                %v347 = vld [vmem:[%s231 + $0x388] sm:$0xff]
                %348 = vst [vmem:[%s232 + $0x1c8] sm:$0xff] %v347
                %v349 = vld [vmem:[%s231 + $0x390] sm:$0xff]
                %350 = vst [vmem:[%s232 + $0x1d0] sm:$0xff] %v349
                %v351 = vld [vmem:[%s231 + $0x398] sm:$0xff]
                %352 = vst [vmem:[%s232 + $0x1d8] sm:$0xff] %v351
                %v353 = vld [vmem:[%s231 + $0x3c0] sm:$0xff]
                %354 = vst [vmem:[%s232 + $0x1e0] sm:$0xff] %v353
                %v355 = vld [vmem:[%s231 + $0x3c8] sm:$0xff]
                %356 = vst [vmem:[%s232 + $0x1e8] sm:$0xff] %v355
                %v357 = vld [vmem:[%s231 + $0x3d0] sm:$0xff]
                %358 = vst [vmem:[%s232 + $0x1f0] sm:$0xff] %v357
                %v359 = vld [vmem:[%s231 + $0x3d8] sm:$0xff]
                %360 = vst [vmem:[%s232 + $0x1f8] sm:$0xff] %v359
                %v361 = vld [vmem:[%s231 + $0x400] sm:$0xff]
                %362 = vst [vmem:[%s232 + $0x200] sm:$0xff] %v361
                %v363 = vld [vmem:[%s231 + $0x408] sm:$0xff]
                %364 = vst [vmem:[%s232 + $0x208] sm:$0xff] %v363
                %v365 = vld [vmem:[%s231 + $0x410] sm:$0xff]
                %366 = vst [vmem:[%s232 + $0x210] sm:$0xff] %v365
                %v367 = vld [vmem:[%s231 + $0x418] sm:$0xff]
                %368 = vst [vmem:[%s232 + $0x218] sm:$0xff] %v367
                %v369 = vld [vmem:[%s231 + $0x440] sm:$0xff]
                %370 = vst [vmem:[%s232 + $0x220] sm:$0xff] %v369
                %v371 = vld [vmem:[%s231 + $0x448] sm:$0xff]
                %372 = vst [vmem:[%s232 + $0x228] sm:$0xff] %v371
                %v373 = vld [vmem:[%s231 + $0x450] sm:$0xff]
                %374 = vst [vmem:[%s232 + $0x230] sm:$0xff] %v373
                %v375 = vld [vmem:[%s231 + $0x458] sm:$0xff]
                %376 = vst [vmem:[%s232 + $0x238] sm:$0xff] %v375
                %v377 = vld [vmem:[%s231 + $0x480] sm:$0xff]
                %378 = vst [vmem:[%s232 + $0x240] sm:$0xff] %v377
                %v379 = vld [vmem:[%s231 + $0x488] sm:$0xff]
                %380 = vst [vmem:[%s232 + $0x248] sm:$0xff] %v379
                %v381 = vld [vmem:[%s231 + $0x490] sm:$0xff]
                %382 = vst [vmem:[%s232 + $0x250] sm:$0xff] %v381
                %v383 = vld [vmem:[%s231 + $0x498] sm:$0xff]
                %384 = vst [vmem:[%s232 + $0x258] sm:$0xff] %v383
                %v385 = vld [vmem:[%s231 + $0x4c0] sm:$0xff]
                %386 = vst [vmem:[%s232 + $0x260] sm:$0xff] %v385
                %v387 = vld [vmem:[%s231 + $0x4c8] sm:$0xff]
                %388 = vst [vmem:[%s232 + $0x268] sm:$0xff] %v387
                %v389 = vld [vmem:[%s231 + $0x4d0] sm:$0xff]
                %390 = vst [vmem:[%s232 + $0x270] sm:$0xff] %v389
                %v391 = vld [vmem:[%s231 + $0x4d8] sm:$0xff]
                %392 = vst [vmem:[%s232 + $0x278] sm:$0xff] %v391
                %v393 = vld [vmem:[%s231 + $0x500] sm:$0xff]
                %394 = vst [vmem:[%s232 + $0x280] sm:$0xff] %v393
                %v395 = vld [vmem:[%s231 + $0x508] sm:$0xff]
                %396 = vst [vmem:[%s232 + $0x288] sm:$0xff] %v395
                %v397 = vld [vmem:[%s231 + $0x510] sm:$0xff]
                %398 = vst [vmem:[%s232 + $0x290] sm:$0xff] %v397
                %v399 = vld [vmem:[%s231 + $0x518] sm:$0xff]
                %400 = vst [vmem:[%s232 + $0x298] sm:$0xff] %v399
                %v401 = vld [vmem:[%s231 + $0x540] sm:$0xff]
                %402 = vst [vmem:[%s232 + $0x2a0] sm:$0xff] %v401
                %v403 = vld [vmem:[%s231 + $0x548] sm:$0xff]
                %404 = vst [vmem:[%s232 + $0x2a8] sm:$0xff] %v403
                %v405 = vld [vmem:[%s231 + $0x550] sm:$0xff]
                %406 = vst [vmem:[%s232 + $0x2b0] sm:$0xff] %v405
                %v407 = vld [vmem:[%s231 + $0x558] sm:$0xff]
                %408 = vst [vmem:[%s232 + $0x2b8] sm:$0xff] %v407
                %v409 = vld [vmem:[%s231 + $0x580] sm:$0xff]
                %410 = vst [vmem:[%s232 + $0x2c0] sm:$0xff] %v409
                %v411 = vld [vmem:[%s231 + $0x588] sm:$0xff]
                %412 = vst [vmem:[%s232 + $0x2c8] sm:$0xff] %v411
                %v413 = vld [vmem:[%s231 + $0x590] sm:$0xff]
                %414 = vst [vmem:[%s232 + $0x2d0] sm:$0xff] %v413
                %v415 = vld [vmem:[%s231 + $0x598] sm:$0xff]
                %416 = vst [vmem:[%s232 + $0x2d8] sm:$0xff] %v415
                %v417 = vld [vmem:[%s231 + $0x5c0] sm:$0xff]
                %418 = vst [vmem:[%s232 + $0x2e0] sm:$0xff] %v417
                %v419 = vld [vmem:[%s231 + $0x5c8] sm:$0xff]
                %420 = vst [vmem:[%s232 + $0x2e8] sm:$0xff] %v419
                %v421 = vld [vmem:[%s231 + $0x5d0] sm:$0xff]
                %422 = vst [vmem:[%s232 + $0x2f0] sm:$0xff] %v421
                %v423 = vld [vmem:[%s231 + $0x5d8] sm:$0xff]
                %424 = vst [vmem:[%s232 + $0x2f8] sm:$0xff] %v423
                %v425 = vld [vmem:[%s231 + $0x600] sm:$0xff]
                %426 = vst [vmem:[%s232 + $0x300] sm:$0xff] %v425
                %v427 = vld [vmem:[%s231 + $0x608] sm:$0xff]
                %428 = vst [vmem:[%s232 + $0x308] sm:$0xff] %v427
                %v429 = vld [vmem:[%s231 + $0x610] sm:$0xff]
                %430 = vst [vmem:[%s232 + $0x310] sm:$0xff] %v429
                %v431 = vld [vmem:[%s231 + $0x618] sm:$0xff]
                %432 = vst [vmem:[%s232 + $0x318] sm:$0xff] %v431
                %v433 = vld [vmem:[%s231 + $0x640] sm:$0xff]
                %434 = vst [vmem:[%s232 + $0x320] sm:$0xff] %v433
                %v435 = vld [vmem:[%s231 + $0x648] sm:$0xff]
                %436 = vst [vmem:[%s232 + $0x328] sm:$0xff] %v435
                %v437 = vld [vmem:[%s231 + $0x650] sm:$0xff]
                %438 = vst [vmem:[%s232 + $0x330] sm:$0xff] %v437
                %v439 = vld [vmem:[%s231 + $0x658] sm:$0xff]
                %440 = vst [vmem:[%s232 + $0x338] sm:$0xff] %v439
                %v441 = vld [vmem:[%s231 + $0x680] sm:$0xff]
                %442 = vst [vmem:[%s232 + $0x340] sm:$0xff] %v441
                %v443 = vld [vmem:[%s231 + $0x688] sm:$0xff]
                %444 = vst [vmem:[%s232 + $0x348] sm:$0xff] %v443
                %v445 = vld [vmem:[%s231 + $0x690] sm:$0xff]
                %446 = vst [vmem:[%s232 + $0x350] sm:$0xff] %v445
                %v447 = vld [vmem:[%s231 + $0x698] sm:$0xff]
                %448 = vst [vmem:[%s232 + $0x358] sm:$0xff] %v447
                %v449 = vld [vmem:[%s231 + $0x6c0] sm:$0xff]
                %450 = vst [vmem:[%s232 + $0x360] sm:$0xff] %v449
                %v451 = vld [vmem:[%s231 + $0x6c8] sm:$0xff]
                %452 = vst [vmem:[%s232 + $0x368] sm:$0xff] %v451
                %v453 = vld [vmem:[%s231 + $0x6d0] sm:$0xff]
                %454 = vst [vmem:[%s232 + $0x370] sm:$0xff] %v453
                %v455 = vld [vmem:[%s231 + $0x6d8] sm:$0xff]
                %456 = vst [vmem:[%s232 + $0x378] sm:$0xff] %v455
                %v457 = vld [vmem:[%s231 + $0x700] sm:$0xff]
                %458 = vst [vmem:[%s232 + $0x380] sm:$0xff] %v457
                %v459 = vld [vmem:[%s231 + $0x708] sm:$0xff]
                %460 = vst [vmem:[%s232 + $0x388] sm:$0xff] %v459
                %v461 = vld [vmem:[%s231 + $0x710] sm:$0xff]
                %462 = vst [vmem:[%s232 + $0x390] sm:$0xff] %v461
                %v463 = vld [vmem:[%s231 + $0x718] sm:$0xff]
                %464 = vst [vmem:[%s232 + $0x398] sm:$0xff] %v463
                %v465 = vld [vmem:[%s231 + $0x740] sm:$0xff]
                %466 = vst [vmem:[%s232 + $0x3a0] sm:$0xff] %v465
                %v467 = vld [vmem:[%s231 + $0x748] sm:$0xff]
                %468 = vst [vmem:[%s232 + $0x3a8] sm:$0xff] %v467
                %v469 = vld [vmem:[%s231 + $0x750] sm:$0xff]
                %470 = vst [vmem:[%s232 + $0x3b0] sm:$0xff] %v469
                %v471 = vld [vmem:[%s231 + $0x758] sm:$0xff]
                %472 = vst [vmem:[%s232 + $0x3b8] sm:$0xff] %v471
                %v473 = vld [vmem:[%s231 + $0x780] sm:$0xff]
                %474 = vst [vmem:[%s232 + $0x3c0] sm:$0xff] %v473
                %v475 = vld [vmem:[%s231 + $0x788] sm:$0xff]
                %476 = vst [vmem:[%s232 + $0x3c8] sm:$0xff] %v475
                %v477 = vld [vmem:[%s231 + $0x790] sm:$0xff]
                %478 = vst [vmem:[%s232 + $0x3d0] sm:$0xff] %v477
                %v479 = vld [vmem:[%s231 + $0x798] sm:$0xff]
                %480 = vst [vmem:[%s232 + $0x3d8] sm:$0xff] %v479
                %v481 = vld [vmem:[%s231 + $0x7c0] sm:$0xff]
                %482 = vst [vmem:[%s232 + $0x3e0] sm:$0xff] %v481
                %v483 = vld [vmem:[%s231 + $0x7c8] sm:$0xff]
                %484 = vst [vmem:[%s232 + $0x3e8] sm:$0xff] %v483
                %v485 = vld [vmem:[%s231 + $0x7d0] sm:$0xff]
                %486 = vst [vmem:[%s232 + $0x3f0] sm:$0xff] %v485
                %v487 = vld [vmem:[%s231 + $0x7d8] sm:$0xff]
                %488 = vst [vmem:[%s232 + $0x3f8] sm:$0xff] %v487
              $region41: #{_lambda_.2} parent=35 // loop_footer
                %s230 = sadd.s32 1, %s226
              $region42: #{_lambda_.2} parent=35 // loop_footer_branch
                %225 = sbr.rel target = $region38
              $region43: #{_lambda_.2} parent=35 // loop_exit
                _
            $region36: #{_lambda_.2} parent=31 // pred_fallthru
              _
            // Predicated region
            $region44: #{_lambda_.2} parent=31 // pred_check
              _
            $region45: #{_lambda_.2} parent=31 // pred_check_branch
              %490 = sbr.rel target = $region47
            $region46: #{_lambda_.2} parent=31 // pred_region
              _
            $region47: #{_lambda_.2} parent=31 // pred_fallthru
              _
          $region32: #{_lambda_.2} parent=27 // pred_fallthru
            _
          %491 = vnop
        $region28: #{_lambda_.2} parent=23 // pred_fallthru
          _
        // Predicated region
        $region48: #{_lambda_.2} parent=23 // pred_check
          %p492 = pneg %p119
        $region49: #{_lambda_.2} parent=23 // pred_check_branch
          %494 = sbr.rel (%p492) target = $region51
        $region50: #{_lambda_.2} parent=23 // pred_region
          %s495 = smul.u32 4, %s19
          %p496 = scmp.lt.s32.totalorder %s495, 7
          %s497 = scalar_select %p496, %s495, 7
          %s498 = smul.addr %s497, 2
          %s499 = scalar_lea.vmem %s3, %s498
          %s500 = smul.u32 4, %s19
        $region51: #{_lambda_.2} parent=23 // pred_fallthru
          _
        // Predicated region
        $region52: #{_lambda_.2} parent=23 // pred_check
          %p501 = pneg %p145
        $region53: #{_lambda_.2} parent=23 // pred_check_branch
          %503 = sbr.rel (%p501) target = $region55
        $region54: #{_lambda_.2} parent=23 // pred_region
          %s504 = smul.u32 4, %s19
          %p505 = scmp.lt.s32.totalorder %s504, 7
          %s506 = scalar_select %p505, %s504, 7
          %s507 = scalar_lea.vmem %s4, %s506
          %s508 = smul.u32 4, %s19
        $region55: #{_lambda_.2} parent=23 // pred_fallthru
          _
      $region24: #{_lambda_.2} parent=5 // pred_fallthru
        _
      %p509 = scmp.le.s32.totalorder 1, %s12
      %p510 = scmp.lt.s32.totalorder %s12, 3
      %p511 = pnand %p509, %p510
      %p512 = pneg %p511
      // Predicated region
      $region56: #{_lambda_.2} parent=5 // pred_check
        _
      $region57: #{_lambda_.2} parent=5 // pred_check_branch
        %514 = sbr.rel (%p511) target = $region59
      $region58: #{_lambda_.2} parent=5 // pred_region
        %s515 = ssub.s32 %s12, 1
        %s516 = sand.u32 %s86, 1
        %s517 = sand.u32 %s86, 1
        %s518 = smul.addr %s517, 1024
        %s519 = scalar_lea.vmem [#allocation4], %s518
        // Predicated region
        $region60: #{_lambda_.2} parent=58 // pred_check
          %p520 = pneg %p99
        $region61: #{_lambda_.2} parent=58 // pred_check_branch
          %522 = sbr.rel (%p520) target = $region63
        $region62: #{_lambda_.2} parent=58 // pred_region
          _
        $region63: #{_lambda_.2} parent=58 // pred_fallthru
          _
        %p523 = pneg %p45
        %p524 = pneg %p42
        %s525 = smul.u32 2, %s22
        %p526 = scmp.lt.s32.totalorder %s525, 1
        %s527 = scalar_select %p526, %s525, 1
        %s528 = smul.addr %s527, 2
        %s529 = scalar_lea.vmem %s1, %s528
        %p530 = pneg %p71
        %p531 = pneg %p68
        %s532 = sand.u32 %s86, 1
        %s533 = sand.u32 %s86, 1
        %s534 = smul.addr %s533, 1024
        %s535 = scalar_lea.vmem [#allocation4], %s534
        %p536 = pneg %p99
        %p537 = pneg %p96
        %s538 = smul.u32 4, %s21
        %p539 = scmp.lt.s32.totalorder %s538, 7
        %s540 = scalar_select %p539, %s538, 7
        %s541 = smul.addr %s540, 2
        %s542 = scalar_lea.vmem %s3, %s541
        %p543 = pneg %p125
        %p544 = pneg %p122
        %s545 = smul.u32 4, %s21
        %p546 = scmp.lt.s32.totalorder %s545, 7
        %s547 = scalar_select %p546, %s545, 7
        %s548 = scalar_lea.vmem %s4, %s547
        %p549 = pneg %p151
        %p550 = pneg %p148
        %p551 = pneg %p177
        %p552 = pneg %p174
        %s553 = smul.u32 4, %s21
        %p554 = scmp.lt.s32.totalorder %s553, 7
        %s555 = scalar_select %p554, %s553, 7
        %s556 = smul.addr %s555, 2
        %s557 = scalar_lea.vmem %s5, %s556
        %s558 = smul.u32 2, %s22
        %p559 = scmp.lt.s32.totalorder %s558, 1
        %s560 = scalar_select %p559, %s558, 1
        %s561 = smul.addr %s560, 2
        %s562 = scalar_lea.vmem %s1, %s561
        %s563 = smul.u32 2, %s22
        %s564 = smul.u32 32, %s22
        %s565 = smul.u32 4, %s21
        %s566 = smul.u32 4, %s21
        %p567 = scmp.lt.s32.totalorder %s566, 7
        %s568 = scalar_select %p567, %s566, 7
        %s569 = smul.addr %s568, 2
        %s570 = scalar_lea.vmem %s3, %s569
        %s571 = smul.u32 4, %s21
        %s572 = smul.u32 4, %s21
        %p573 = scmp.lt.s32.totalorder %s572, 7
        %s574 = scalar_select %p573, %s572, 7
        %s575 = scalar_lea.vmem %s4, %s574
        %s576 = smul.u32 4, %s21
        %s577 = smul.u32 4, %s21
        %p578 = scmp.lt.s32.totalorder %s577, 7
        %s579 = scalar_select %p578, %s577, 7
        %s580 = smul.addr %s579, 2
        %s581 = scalar_lea.vmem %s5, %s580
        %s582 = smul.u32 4, %s21
        %p583 = scmp.eq.s32.totalorder %s22, 0
        // Predicated region
        $region64: #{_lambda_.2} parent=58 // pred_check
          %p584 = pneg %p583
        $region65: #{_lambda_.2} parent=58 // pred_check_branch
          %586 = sbr.rel (%p584) target = $region67
        $region66: #{_lambda_.2} parent=58 // pred_region
          %587 = vst [vmem:[#allocation2] sm:$0xff] 0.0
        $region67: #{_lambda_.2} parent=58 // pred_fallthru
          _
        %v588 = vld [vmem:[#allocation2] sm:$0xff]
        %v589 = vld [vmem:[%s562] sm:$0xf]
        %v590 = vld [vmem:[%s519] sm:$0xff]
        %v591 = vld [vmem:[%s519 + $0x8] sm:$0xff]
        %v592 = vld [vmem:[%s519 + $0x10] sm:$0xff]
        %v593 = vld [vmem:[%s519 + $0x18] sm:$0xff]
        %v594 = vld [vmem:[%s519 + $0x20] sm:$0xff]
        %v595 = vld [vmem:[%s519 + $0x28] sm:$0xff]
        %v596 = vld [vmem:[%s519 + $0x30] sm:$0xff]
        %v597 = vld [vmem:[%s519 + $0x38] sm:$0xff]
        %v598 = vld [vmem:[%s519 + $0x40] sm:$0xff]
        %v599 = vld [vmem:[%s519 + $0x48] sm:$0xff]
        %v600 = vld [vmem:[%s519 + $0x50] sm:$0xff]
        %v601 = vld [vmem:[%s519 + $0x58] sm:$0xff]
        %v602 = vld [vmem:[%s519 + $0x60] sm:$0xff]
        %v603 = vld [vmem:[%s519 + $0x68] sm:$0xff]
        %v604 = vld [vmem:[%s519 + $0x70] sm:$0xff]
        %v605 = vld [vmem:[%s519 + $0x78] sm:$0xff]
        %v606 = vld [vmem:[%s519 + $0x80] sm:$0xff]
        %v607 = vld [vmem:[%s519 + $0x88] sm:$0xff]
        %v608 = vld [vmem:[%s519 + $0x90] sm:$0xff]
        %v609 = vld [vmem:[%s519 + $0x98] sm:$0xff]
        %v610 = vld [vmem:[%s519 + $0xa0] sm:$0xff]
        %v611 = vld [vmem:[%s519 + $0xa8] sm:$0xff]
        %v612 = vld [vmem:[%s519 + $0xb0] sm:$0xff]
        %v613 = vld [vmem:[%s519 + $0xb8] sm:$0xff]
        %v614 = vld [vmem:[%s519 + $0xc0] sm:$0xff]
        %v615 = vld [vmem:[%s519 + $0xc8] sm:$0xff]
        %v616 = vld [vmem:[%s519 + $0xd0] sm:$0xff]
        %v617 = vld [vmem:[%s519 + $0xd8] sm:$0xff]
        %v618 = vld [vmem:[%s519 + $0xe0] sm:$0xff]
        %v619 = vld [vmem:[%s519 + $0xe8] sm:$0xff]
        %v620 = vld [vmem:[%s519 + $0xf0] sm:$0xff]
        %v621 = vld [vmem:[%s519 + $0xf8] sm:$0xff]
        %v622 = vld [vmem:[%s519 + $0x100] sm:$0xff]
        %v623 = vld [vmem:[%s519 + $0x108] sm:$0xff]
        %v624 = vld [vmem:[%s519 + $0x110] sm:$0xff]
        %v625 = vld [vmem:[%s519 + $0x118] sm:$0xff]
        %v626 = vld [vmem:[%s519 + $0x120] sm:$0xff]
        %v627 = vld [vmem:[%s519 + $0x128] sm:$0xff]
        %v628 = vld [vmem:[%s519 + $0x130] sm:$0xff]
        %v629 = vld [vmem:[%s519 + $0x138] sm:$0xff]
        %v630 = vld [vmem:[%s519 + $0x140] sm:$0xff]
        %v631 = vld [vmem:[%s519 + $0x148] sm:$0xff]
        %v632 = vld [vmem:[%s519 + $0x150] sm:$0xff]
        %v633 = vld [vmem:[%s519 + $0x158] sm:$0xff]
        %v634 = vld [vmem:[%s519 + $0x160] sm:$0xff]
        %v635 = vld [vmem:[%s519 + $0x168] sm:$0xff]
        %v636 = vld [vmem:[%s519 + $0x170] sm:$0xff]
        %v637 = vld [vmem:[%s519 + $0x178] sm:$0xff]
        %v638 = vld [vmem:[%s519 + $0x180] sm:$0xff]
        %v639 = vld [vmem:[%s519 + $0x188] sm:$0xff]
        %v640 = vld [vmem:[%s519 + $0x190] sm:$0xff]
        %v641 = vld [vmem:[%s519 + $0x198] sm:$0xff]
        %v642 = vld [vmem:[%s519 + $0x1a0] sm:$0xff]
        %v643 = vld [vmem:[%s519 + $0x1a8] sm:$0xff]
        %v644 = vld [vmem:[%s519 + $0x1b0] sm:$0xff]
        %v645 = vld [vmem:[%s519 + $0x1b8] sm:$0xff]
        %v646 = vld [vmem:[%s519 + $0x1c0] sm:$0xff]
        %v647 = vld [vmem:[%s519 + $0x1c8] sm:$0xff]
        %v648 = vld [vmem:[%s519 + $0x1d0] sm:$0xff]
        %v649 = vld [vmem:[%s519 + $0x1d8] sm:$0xff]
        %v650 = vld [vmem:[%s519 + $0x1e0] sm:$0xff]
        %v651 = vld [vmem:[%s519 + $0x1e8] sm:$0xff]
        %v652 = vld [vmem:[%s519 + $0x1f0] sm:$0xff]
        %v653 = vld [vmem:[%s519 + $0x1f8] sm:$0xff]
        %v654 = vld [vmem:[%s519 + $0x200] sm:$0xff]
        %v655 = vld [vmem:[%s519 + $0x208] sm:$0xff]
        %v656 = vld [vmem:[%s519 + $0x210] sm:$0xff]
        %v657 = vld [vmem:[%s519 + $0x218] sm:$0xff]
        %v658 = vld [vmem:[%s519 + $0x220] sm:$0xff]
        %v659 = vld [vmem:[%s519 + $0x228] sm:$0xff]
        %v660 = vld [vmem:[%s519 + $0x230] sm:$0xff]
        %v661 = vld [vmem:[%s519 + $0x238] sm:$0xff]
        %v662 = vld [vmem:[%s519 + $0x240] sm:$0xff]
        %v663 = vld [vmem:[%s519 + $0x248] sm:$0xff]
        %v664 = vld [vmem:[%s519 + $0x250] sm:$0xff]
        %v665 = vld [vmem:[%s519 + $0x258] sm:$0xff]
        %v666 = vld [vmem:[%s519 + $0x260] sm:$0xff]
        %v667 = vld [vmem:[%s519 + $0x268] sm:$0xff]
        %v668 = vld [vmem:[%s519 + $0x270] sm:$0xff]
        %v669 = vld [vmem:[%s519 + $0x278] sm:$0xff]
        %v670 = vld [vmem:[%s519 + $0x280] sm:$0xff]
        %v671 = vld [vmem:[%s519 + $0x288] sm:$0xff]
        %v672 = vld [vmem:[%s519 + $0x290] sm:$0xff]
        %v673 = vld [vmem:[%s519 + $0x298] sm:$0xff]
        %v674 = vld [vmem:[%s519 + $0x2a0] sm:$0xff]
        %v675 = vld [vmem:[%s519 + $0x2a8] sm:$0xff]
        %v676 = vld [vmem:[%s519 + $0x2b0] sm:$0xff]
        %v677 = vld [vmem:[%s519 + $0x2b8] sm:$0xff]
        %v678 = vld [vmem:[%s519 + $0x2c0] sm:$0xff]
        %v679 = vld [vmem:[%s519 + $0x2c8] sm:$0xff]
        %v680 = vld [vmem:[%s519 + $0x2d0] sm:$0xff]
        %v681 = vld [vmem:[%s519 + $0x2d8] sm:$0xff]
        %v682 = vld [vmem:[%s519 + $0x2e0] sm:$0xff]
        %v683 = vld [vmem:[%s519 + $0x2e8] sm:$0xff]
        %v684 = vld [vmem:[%s519 + $0x2f0] sm:$0xff]
        %v685 = vld [vmem:[%s519 + $0x2f8] sm:$0xff]
        %v686 = vld [vmem:[%s519 + $0x300] sm:$0xff]
        %v687 = vld [vmem:[%s519 + $0x308] sm:$0xff]
        %v688 = vld [vmem:[%s519 + $0x310] sm:$0xff]
        %v689 = vld [vmem:[%s519 + $0x318] sm:$0xff]
        %v690 = vld [vmem:[%s519 + $0x320] sm:$0xff]
        %v691 = vld [vmem:[%s519 + $0x328] sm:$0xff]
        %v692 = vld [vmem:[%s519 + $0x330] sm:$0xff]
        %v693 = vld [vmem:[%s519 + $0x338] sm:$0xff]
        %v694 = vld [vmem:[%s519 + $0x340] sm:$0xff]
        %v695 = vld [vmem:[%s519 + $0x348] sm:$0xff]
        %v696 = vld [vmem:[%s519 + $0x350] sm:$0xff]
        %v697 = vld [vmem:[%s519 + $0x358] sm:$0xff]
        %v698 = vld [vmem:[%s519 + $0x360] sm:$0xff]
        %v699 = vld [vmem:[%s519 + $0x368] sm:$0xff]
        %v700 = vld [vmem:[%s519 + $0x370] sm:$0xff]
        %v701 = vld [vmem:[%s519 + $0x378] sm:$0xff]
        %v702 = vld [vmem:[%s519 + $0x380] sm:$0xff]
        %v703 = vld [vmem:[%s519 + $0x388] sm:$0xff]
        %v704 = vld [vmem:[%s519 + $0x390] sm:$0xff]
        %v705 = vld [vmem:[%s519 + $0x398] sm:$0xff]
        %v706 = vld [vmem:[%s519 + $0x3a0] sm:$0xff]
        %v707 = vld [vmem:[%s519 + $0x3a8] sm:$0xff]
        %v708 = vld [vmem:[%s519 + $0x3b0] sm:$0xff]
        %v709 = vld [vmem:[%s519 + $0x3b8] sm:$0xff]
        %v710 = vld [vmem:[%s519 + $0x3c0] sm:$0xff]
        %v711 = vld [vmem:[%s519 + $0x3c8] sm:$0xff]
        %v712 = vld [vmem:[%s519 + $0x3d0] sm:$0xff]
        %v713 = vld [vmem:[%s519 + $0x3d8] sm:$0xff]
        %v714 = vld [vmem:[%s519 + $0x3e0] sm:$0xff]
        %v715 = vld [vmem:[%s519 + $0x3e8] sm:$0xff]
        %v716 = vld [vmem:[%s519 + $0x3f0] sm:$0xff]
        %v717 = vld [vmem:[%s519 + $0x3f8] sm:$0xff]
        %v720 = vunpack.c.l.s4 1983009808
        %v721 = vunpack.c.0.s8 %v720
        %v722 = vlaneseq
        %v723 = vshrl.u32 %v722, 7
        %v724 = vsub.s32 %v721, %v723
        %v725 = vrot.slane %v589, %v724
        %v726 = vcombine.high %v725, %v725
        %729 = vmatprep.subr.mxu0 %v591
        %730 = vmatpush1.msra.mxu0 %v590
        %731 = vmatprep.subr.mxu0 %v595
        %732 = vmatpush1.msra.mxu0 %v594
        %733 = vmatprep.subr.mxu0 %v599
        %734 = vmatpush1.msra.mxu0 %v598
        %735 = vmatprep.subr.mxu0 %v603
        %736 = vmatpush1.msra.mxu0 %v602
        %737 = vmatprep.subr.mxu0 %v607
        %738 = vmatpush1.msra.mxu0 %v606
        %739 = vmatprep.subr.mxu0 %v611
        %740 = vmatpush1.msra.mxu0 %v610
        %741 = vmatprep.subr.mxu0 %v615
        %742 = vmatpush1.msra.mxu0 %v614
        %743 = vmatprep.subr.mxu0 %v619
        %744 = vmatpush1.msra.mxu0 %v618
        %745 = vmatprep.subr.mxu0 %v623
        %746 = vmatpush1.msra.mxu0 %v622
        %747 = vmatprep.subr.mxu0 %v627
        %748 = vmatpush1.msra.mxu0 %v626
        %749 = vmatprep.subr.mxu0 %v631
        %750 = vmatpush1.msra.mxu0 %v630
        %751 = vmatprep.subr.mxu0 %v635
        %752 = vmatpush1.msra.mxu0 %v634
        %753 = vmatprep.subr.mxu0 %v639
        %754 = vmatpush1.msra.mxu0 %v638
        %755 = vmatprep.subr.mxu0 %v643
        %756 = vmatpush1.msra.mxu0 %v642
        %757 = vmatprep.subr.mxu0 %v647
        %758 = vmatpush1.msra.mxu0 %v646
        %759 = vmatprep.subr.mxu0 %v651
        %760 = vmatpush1.msra.mxu0 %v650
        %761 = vmatprep.subr.mxu0 %v655
        %762 = vmatpush1.msra.mxu0 %v654
        %763 = vmatprep.subr.mxu0 %v659
        %764 = vmatpush1.msra.mxu0 %v658
        %765 = vmatprep.subr.mxu0 %v663
        %766 = vmatpush1.msra.mxu0 %v662
        %767 = vmatprep.subr.mxu0 %v667
        %768 = vmatpush1.msra.mxu0 %v666
        %769 = vmatprep.subr.mxu0 %v671
        %770 = vmatpush1.msra.mxu0 %v670
        %771 = vmatprep.subr.mxu0 %v675
        %772 = vmatpush1.msra.mxu0 %v674
        %773 = vmatprep.subr.mxu0 %v679
        %774 = vmatpush1.msra.mxu0 %v678
        %775 = vmatprep.subr.mxu0 %v683
        %776 = vmatpush1.msra.mxu0 %v682
        %777 = vmatprep.subr.mxu0 %v687
        %778 = vmatpush1.msra.mxu0 %v686
        %779 = vmatprep.subr.mxu0 %v691
        %780 = vmatpush1.msra.mxu0 %v690
        %781 = vmatprep.subr.mxu0 %v695
        %782 = vmatpush1.msra.mxu0 %v694
        %783 = vmatprep.subr.mxu0 %v699
        %784 = vmatpush1.msra.mxu0 %v698
        %785 = vmatprep.subr.mxu0 %v703
        %786 = vmatpush1.msra.mxu0 %v702
        %787 = vmatprep.subr.mxu0 %v707
        %788 = vmatpush1.msra.mxu0 %v706
        %789 = vmatprep.subr.mxu0 %v711
        %790 = vmatpush1.msra.mxu0 %v710
        %791 = vmatprep.subr.mxu0 %v715
        %792 = vmatpush1.msra.mxu0 %v714
        %793 = vmatprep.mubr.f32.mxu0 %v726
        %794 = vmatmul.mubr.f32.gmra.mrb[0].mxu0 %v725
        %v795 = vpop.f32.mrb[0].mxu0
        %v796 = vadd.f32 0.0, %v795
        %v797 = vpop.f32.mrb[0].mxu0
        %v798 = vadd.f32 0.0, %v797
        %799 = vdwg.mxu0
        %800 = vmatprep.subr.mxu0 %v593
        %801 = vmatpush1.msra.mxu0 %v592
        %802 = vmatprep.subr.mxu0 %v597
        %803 = vmatpush1.msra.mxu0 %v596
        %804 = vmatprep.subr.mxu0 %v601
        %805 = vmatpush1.msra.mxu0 %v600
        %806 = vmatprep.subr.mxu0 %v605
        %807 = vmatpush1.msra.mxu0 %v604
        %808 = vmatprep.subr.mxu0 %v609
        %809 = vmatpush1.msra.mxu0 %v608
        %810 = vmatprep.subr.mxu0 %v613
        %811 = vmatpush1.msra.mxu0 %v612
        %812 = vmatprep.subr.mxu0 %v617
        %813 = vmatpush1.msra.mxu0 %v616
        %814 = vmatprep.subr.mxu0 %v621
        %815 = vmatpush1.msra.mxu0 %v620
        %816 = vmatprep.subr.mxu0 %v625
        %817 = vmatpush1.msra.mxu0 %v624
        %818 = vmatprep.subr.mxu0 %v629
        %819 = vmatpush1.msra.mxu0 %v628
        %820 = vmatprep.subr.mxu0 %v633
        %821 = vmatpush1.msra.mxu0 %v632
        %822 = vmatprep.subr.mxu0 %v637
        %823 = vmatpush1.msra.mxu0 %v636
        %824 = vmatprep.subr.mxu0 %v641
        %825 = vmatpush1.msra.mxu0 %v640
        %826 = vmatprep.subr.mxu0 %v645
        %827 = vmatpush1.msra.mxu0 %v644
        %828 = vmatprep.subr.mxu0 %v649
        %829 = vmatpush1.msra.mxu0 %v648
        %830 = vmatprep.subr.mxu0 %v653
        %831 = vmatpush1.msra.mxu0 %v652
        %832 = vmatprep.subr.mxu0 %v657
        %833 = vmatpush1.msra.mxu0 %v656
        %834 = vmatprep.subr.mxu0 %v661
        %835 = vmatpush1.msra.mxu0 %v660
        %836 = vmatprep.subr.mxu0 %v665
        %837 = vmatpush1.msra.mxu0 %v664
        %838 = vmatprep.subr.mxu0 %v669
        %839 = vmatpush1.msra.mxu0 %v668
        %840 = vmatprep.subr.mxu0 %v673
        %841 = vmatpush1.msra.mxu0 %v672
        %842 = vmatprep.subr.mxu0 %v677
        %843 = vmatpush1.msra.mxu0 %v676
        %844 = vmatprep.subr.mxu0 %v681
        %845 = vmatpush1.msra.mxu0 %v680
        %846 = vmatprep.subr.mxu0 %v685
        %847 = vmatpush1.msra.mxu0 %v684
        %848 = vmatprep.subr.mxu0 %v689
        %849 = vmatpush1.msra.mxu0 %v688
        %850 = vmatprep.subr.mxu0 %v693
        %851 = vmatpush1.msra.mxu0 %v692
        %852 = vmatprep.subr.mxu0 %v697
        %853 = vmatpush1.msra.mxu0 %v696
        %854 = vmatprep.subr.mxu0 %v701
        %855 = vmatpush1.msra.mxu0 %v700
        %856 = vmatprep.subr.mxu0 %v705
        %857 = vmatpush1.msra.mxu0 %v704
        %858 = vmatprep.subr.mxu0 %v709
        %859 = vmatpush1.msra.mxu0 %v708
        %860 = vmatprep.subr.mxu0 %v713
        %861 = vmatpush1.msra.mxu0 %v712
        %862 = vmatprep.subr.mxu0 %v717
        %863 = vmatpush1.msra.mxu0 %v716
        %864 = vmatprep.mubr.f32.mxu0 %v726
        %865 = vmatmul.mubr.f32.gmra.mrb[0].mxu0 %v725
        %v866 = vpop.f32.mrb[0].mxu0
        %v867 = vadd.f32 0.0, %v866
        %v868 = vpop.f32.mrb[0].mxu0
        %v869 = vadd.f32 0.0, %v868
        %870 = vdwg.mxu0
        %v875 = vcombine.low %v796, %v798
        %v876 = vcombine.low %v867, %v869
        %v878 = vunpack.c.l.s4 1983009808
        %v879 = vunpack.c.0.s8 %v878
        %v880 = vlaneseq
        %v881 = vshrl.u32 %v880, 7
        %v882 = vsub.s32 %v879, %v881
        %v883 = vrot.slane %v875, %v882
        %v885 = vunpack.c.l.s4 1983009808
        %v886 = vunpack.c.0.s8 %v885
        %v887 = vlaneseq
        %v888 = vshrl.u32 %v887, 7
        %v889 = vsub.s32 %v886, %v888
        %v890 = vrot.slane %v876, %v889
        %v891 = vcombine.low %v883, %v890
        %v893 = vadd.f32 %v588, %v891
        %894 = vst [vmem:[#allocation2] sm:$0xff] %v893
        // Predicated region
        $region68: #{_lambda_.2} parent=58 // pred_check
          %p895 = pneg %p583
        $region69: #{_lambda_.2} parent=58 // pred_check_branch
          %897 = sbr.rel (%p895) target = $region71
        $region70: #{_lambda_.2} parent=58 // pred_region
          %s898 = sld [smem:[#allocation3]]
          %v899 = vld [vmem:[%s570] sm:$0xff]
          %v900 = vld [vmem:[#allocation2] sm:$0xff]
          %v901 = vld [vmem:[%s575] sm:$0xf]
          %vm902 = vweird.f32 %v899
          %vm903 = vmxor %vm902, 1
          %v904 = vsel %vm903, %v899, 0.0
          %v905 = vmul.f32 %v904, %v900
          %v907 = vlaneseq
          %v908 = vshrl.u32 %v907, 7
          %v909 = vsub.s32 0, %v908
          %v910 = vrot.slane %v901, %v909
          %v911 = vlaneseq
          %v912 = vshrl.u32 %v911, 7
          %v913 = vsub.s32 1, %v912
          %v914 = vrot.slane %v901, %v913
          %v915 = vlaneseq
          %v916 = vshrl.u32 %v915, 7
          %v917 = vsub.s32 2, %v916
          %v918 = vrot.slane %v901, %v917
          %v919 = vlaneseq
          %v920 = vshrl.u32 %v919, 7
          %v921 = vsub.s32 3, %v920
          %v922 = vrot.slane %v901, %v921
          %v923 = vcombine.low %v910, %v914
          %v924 = vcombine.low %v918, %v922
          %v926 = vunpack.c.l.s4 1983009808
          %v927 = vunpack.c.0.s8 %v926
          %v928 = vlaneseq
          %v929 = vshrl.u32 %v928, 7
          %v930 = vsub.s32 %v927, %v929
          %v931 = vrot.slane %v923, %v930
          %v933 = vunpack.c.l.s4 1983009808
          %v934 = vunpack.c.0.s8 %v933
          %v935 = vlaneseq
          %v936 = vshrl.u32 %v935, 7
          %v937 = vsub.s32 %v934, %v936
          %v938 = vrot.slane %v924, %v937
          %v939 = vcombine.low %v931, %v938
          %v941 = vmul.f32 %v905, %v939
          %vm942 = vweird.f32 %v941
          %vm943 = vmxor %vm942, 1
          %v944 = vsel %vm943, %v941, 0.0
          %v945 = vstv %s898
          %v946 = vmul.f32 %v945, %v901
          %v948 = vlaneseq
          %v949 = vshrl.u32 %v948, 7
          %v950 = vsub.s32 0, %v949
          %v951 = vrot.slane %v946, %v950
          %v952 = vlaneseq
          %v953 = vshrl.u32 %v952, 7
          %v954 = vsub.s32 1, %v953
          %v955 = vrot.slane %v946, %v954
          %v956 = vlaneseq
          %v957 = vshrl.u32 %v956, 7
          %v958 = vsub.s32 2, %v957
          %v959 = vrot.slane %v946, %v958
          %v960 = vlaneseq
          %v961 = vshrl.u32 %v960, 7
          %v962 = vsub.s32 3, %v961
          %v963 = vrot.slane %v946, %v962
          %v969 = vcombine.high %v904, %v904
          %v971 = vunpack.c.l.s4 1983009808
          %v972 = vunpack.c.0.s8 %v971
          %v973 = vlaneseq
          %v974 = vshrl.u32 %v973, 7
          %v975 = vsub.s32 %v972, %v974
          %v976 = vrot.slane %v904, %v975
          %v978 = vunpack.c.l.s4 1983009808
          %v979 = vunpack.c.0.s8 %v978
          %v980 = vlaneseq
          %v981 = vshrl.u32 %v980, 7
          %v982 = vsub.s32 %v979, %v981
          %v983 = vrot.slane %v969, %v982
          %v984 = vcombine.high %v976, %v976
          %v985 = vcombine.high %v983, %v983
          %v990 = vmul.f32 %v951, %v976
          %v991 = vmul.f32 %v955, %v984
          %v992 = vmul.f32 %v959, %v983
          %v993 = vmul.f32 %v963, %v985
          %v994 = vsub.f32 1.0, %v990
          %v995 = vsub.f32 1.0, %v991
          %v996 = vsub.f32 1.0, %v992
          %v997 = vsub.f32 1.0, %v993
          %v998 = vmul.f32 %v994, %v994
          %v999 = vmul.f32 %v995, %v995
          %v1000 = vmul.f32 %v996, %v996
          %v1001 = vmul.f32 %v997, %v997
          %v1002 = vmul.f32 %v946, 4.0
          %v1004 = vlaneseq
          %v1005 = vshrl.u32 %v1004, 7
          %v1006 = vsub.s32 0, %v1005
          %v1007 = vrot.slane %v1002, %v1006
          %v1008 = vlaneseq
          %v1009 = vshrl.u32 %v1008, 7
          %v1010 = vsub.s32 1, %v1009
          %v1011 = vrot.slane %v1002, %v1010
          %v1012 = vlaneseq
          %v1013 = vshrl.u32 %v1012, 7
          %v1014 = vsub.s32 2, %v1013
          %v1015 = vrot.slane %v1002, %v1014
          %v1016 = vlaneseq
          %v1017 = vshrl.u32 %v1016, 7
          %v1018 = vsub.s32 3, %v1017
          %v1019 = vrot.slane %v1002, %v1018
          %v1025 = vcombine.high %v944, %v944
          %v1027 = vunpack.c.l.s4 1983009808
          %v1028 = vunpack.c.0.s8 %v1027
          %v1029 = vlaneseq
          %v1030 = vshrl.u32 %v1029, 7
          %v1031 = vsub.s32 %v1028, %v1030
          %v1032 = vrot.slane %v944, %v1031
          %v1034 = vunpack.c.l.s4 1983009808
          %v1035 = vunpack.c.0.s8 %v1034
          %v1036 = vlaneseq
          %v1037 = vshrl.u32 %v1036, 7
          %v1038 = vsub.s32 %v1035, %v1037
          %v1039 = vrot.slane %v1025, %v1038
          %v1040 = vcombine.high %v1032, %v1032
          %v1041 = vcombine.high %v1039, %v1039
          %v1046 = vmul.f32 %v1007, %v1032
          %v1047 = vmul.f32 %v1011, %v1040
          %v1048 = vmul.f32 %v1015, %v1039
          %v1049 = vmul.f32 %v1019, %v1041
          %v1050 = vadd.f32 %v998, %v1046
          %v1051 = vadd.f32 %v999, %v1047
          %v1052 = vadd.f32 %v1000, %v1048
          %v1053 = vadd.f32 %v1001, %v1049
          %v1054 = vrsqrt.pop %v1050
          %v1055 = vmul.f32 %v1050, %v1054
          %vm1056 = vcmp.eq.f32.partialorder %v1050, inf
          %v1057 = vsel %vm1056, %v1050, %v1055
          %vm1058 = vcmp.eq.f32.partialorder %v1050, 0.0
          %v1059 = vand.u32 %v1050, 2147483648
          %v1060 = vsel %vm1058, %v1059, %v1057
          %v1061 = vrsqrt.pop %v1051
          %v1062 = vmul.f32 %v1051, %v1061
          %vm1063 = vcmp.eq.f32.partialorder %v1051, inf
          %v1064 = vsel %vm1063, %v1051, %v1062
          %vm1065 = vcmp.eq.f32.partialorder %v1051, 0.0
          %v1066 = vand.u32 %v1051, 2147483648
          %v1067 = vsel %vm1065, %v1066, %v1064
          %v1068 = vrsqrt.pop %v1052
          %v1069 = vmul.f32 %v1052, %v1068
          %vm1070 = vcmp.eq.f32.partialorder %v1052, inf
          %v1071 = vsel %vm1070, %v1052, %v1069
          %vm1072 = vcmp.eq.f32.partialorder %v1052, 0.0
          %v1073 = vand.u32 %v1052, 2147483648
          %v1074 = vsel %vm1072, %v1073, %v1071
          %v1075 = vrsqrt.pop %v1053
          %v1076 = vmul.f32 %v1053, %v1075
          %vm1077 = vcmp.eq.f32.partialorder %v1053, inf
          %v1078 = vsel %vm1077, %v1053, %v1076
          %vm1079 = vcmp.eq.f32.partialorder %v1053, 0.0
          %v1080 = vand.u32 %v1053, 2147483648
          %v1081 = vsel %vm1079, %v1080, %v1078
          %v1082 = vadd.f32 %v994, %v1060
          %v1083 = vadd.f32 %v995, %v1067
          %v1084 = vadd.f32 %v996, %v1074
          %v1085 = vadd.f32 %v997, %v1081
          %v1086 = vmul.f32 %v944, 2.0
          %v1087 = vrcp.pop %v1082
          %v1088 = vrcp.pop %v1083
          %v1089 = vrcp.pop %v1084
          %v1090 = vrcp.pop %v1085
          %v1095 = vcombine.low %v1087, %v1088
          %v1096 = vcombine.low %v1089, %v1090
          %v1098 = vunpack.c.l.s4 1983009808
          %v1099 = vunpack.c.0.s8 %v1098
          %v1100 = vlaneseq
          %v1101 = vshrl.u32 %v1100, 7
          %v1102 = vsub.s32 %v1099, %v1101
          %v1103 = vrot.slane %v1095, %v1102
          %v1105 = vunpack.c.l.s4 1983009808
          %v1106 = vunpack.c.0.s8 %v1105
          %v1107 = vlaneseq
          %v1108 = vshrl.u32 %v1107, 7
          %v1109 = vsub.s32 %v1106, %v1108
          %v1110 = vrot.slane %v1096, %v1109
          %v1111 = vcombine.low %v1103, %v1110
          %v1113 = vmul.f32 %v1086, %v1111
          %1114 = vst [vmem:[%s581] sm:$0xff] %v1113
        $region71: #{_lambda_.2} parent=58 // pred_fallthru
          _
        %s1115 = smul.u32 4, %s21
        %p1116 = scmp.lt.s32.totalorder %s1115, 7
        %s1117 = scalar_select %p1116, %s1115, 7
        %s1118 = smul.addr %s1117, 2
        %s1119 = scalar_lea.vmem %s5, %s1118
        // Predicated region
        $region72: #{_lambda_.2} parent=58 // pred_check
          %p1120 = pneg %p174
        $region73: #{_lambda_.2} parent=58 // pred_check_branch
          %1122 = sbr.rel (%p1120) target = $region75
        $region74: #{_lambda_.2} parent=58 // pred_region
          %s1123 = smul.u32 4, %s21
        $region75: #{_lambda_.2} parent=58 // pred_fallthru
          _
      $region59: #{_lambda_.2} parent=5 // pred_fallthru
        _
      %p1124 = scmp.le.s32.totalorder 2, %s12
      // Predicated region
      $region76: #{_lambda_.2} parent=5 // pred_check
        %p1125 = pneg %p1124
      $region77: #{_lambda_.2} parent=5 // pred_check_branch
        %1127 = sbr.rel (%p1125) target = $region79
      $region78: #{_lambda_.2} parent=5 // pred_region
        %s1128 = ssub.s32 %s12, 2
        // Predicated region
        $region80: #{_lambda_.2} parent=78 // pred_check
          %p1129 = pneg %p180
        $region81: #{_lambda_.2} parent=78 // pred_check_branch
          %1131 = sbr.rel (%p1129) target = $region83
        $region82: #{_lambda_.2} parent=78 // pred_region
          %s1132 = smul.u32 4, %s23
          %p1133 = scmp.lt.s32.totalorder %s1132, 7
          %s1134 = scalar_select %p1133, %s1132, 7
          %s1135 = smul.addr %s1134, 2
          %s1136 = scalar_lea.vmem %s5, %s1135
        $region83: #{_lambda_.2} parent=78 // pred_fallthru
          _
      $region79: #{_lambda_.2} parent=5 // pred_fallthru
        _
    $region6: #{_lambda_.2} parent=1 // loop_footer
      %s16 = sadd.s32 1, %s12
    $region7: #{_lambda_.2} parent=1 // loop_footer_branch
      %11 = sbr.rel target = $region3
    $region8: #{_lambda_.2} parent=1 // loop_exit
      _

</llo_original>
